<compile_context>
chip_gen: v6e
topology: v6e:2x2x1
jax: 0.10.0
libtpu: 0.0.40
codegen_flags: <defaults>
</compile_context>

<pallas_src>
import functools

import jax
import jax.numpy as jnp
from jax.experimental import pallas as pl
from jax.experimental.pallas import tpu as pltpu


# ----------------------------------------------------------------------------
# Generation-aware budgets / tile targets
# ----------------------------------------------------------------------------
def _vmem_budget_bytes():
    """~75% of physical VMEM (leaves compiler-scratch headroom); capped at 100 MiB."""
    cap = 64 << 20  # conservative fallback if the query fails
    try:
        cap = int(pltpu.get_tpu_info().vmem_capacity_bytes)
    except Exception:
        pass
    return int(min(cap - cap // 4, 100 << 20))


def _tile_targets(budget):
    """(tn_target, tk_target) for the tiled path, by available VMEM budget."""
    if budget >= (90 << 20):
        # v5e / v6e (128 MiB VMEM): 16 MiB bf16 A tile, 32 MiB double-buffered.
        return 2048, 4096
    # v7x-like (64 MiB VMEM): 8 MiB bf16 A tile, 16 MiB double-buffered.
    return 2048, 2048


def _use_fused_path(n, d, budget, force_tiled):
    if force_tiled:
        return False
    a_bytes = 2  # bf16 adjacency
    # Grid-less fused call: A resident once (no double-buffering), plus small
    # X / acc / out f32 buffers and slack.
    need = n * n * a_bytes + 6 * d * n * 4 + (2 << 20)
    if need > int(0.7 * budget):
        return False
    # Small-VMEM parts (v7x-like) have 2 TensorCores: a single-step fused kernel
    # leaves one core idle, so prefer the tiled path (parallel column axis)
    # unless the adjacency is tiny and launch overhead dominates.
    if budget < (60 << 20) and n * n * a_bytes > (4 << 20):
        return False
    return True


# ----------------------------------------------------------------------------
# Fused kernel: all n_layers propagations + layer mean, A read from HBM once.
# Grid-less pallas_call -> whole operands resident in VMEM (single copy).
# ----------------------------------------------------------------------------
def _fused_lightgcn_kernel(adj_ref, x0_ref, out_ref, *, n_layers):
    # adj_ref: (N, N) bf16 = A^T (== A for LightGCN's symmetric norm adjacency)
    # x0_ref : (D, N) f32 feature-major layer-0 embeddings
    # out_ref: (D, N) f32 mean over layers 0..n_layers (lane-dense on N)
    a = adj_ref[...]
    x = x0_ref[...]                      # f32
    acc = x                              # running sum in f32
    for _ in range(n_layers):            # n_layers is small and static
        x = jnp.dot(x.astype(a.dtype), a, preferred_element_type=jnp.float32)
        acc = acc + x
    out_ref[...] = acc * (1.0 / float(n_layers + 1))


def _fused_lightgcn(adj_t, x0, n_layers, vmem_limit):
    D, N = x0.shape
    return pl.pallas_call(
        functools.partial(_fused_lightgcn_kernel, n_layers=n_layers),
        out_shape=jax.ShapeDtypeStruct((D, N), jnp.float32),
        compiler_params=pltpu.CompilerParams(vmem_limit_bytes=vmem_limit),
    )(adj_t, x0)


# ----------------------------------------------------------------------------
# Tiled streaming propagation: one layer, X_new = X @ A^T (feature-major),
# with the running layer sum folded in as a second output.
# ----------------------------------------------------------------------------
def _propagate_kernel(x_ref, a_ref, acc_in_ref, xout_ref, acc_out_ref,
                      part_ref, *, tk, x_resident, scale):
    # x_ref     : (D, N) bf16 resident  OR  (D, tk) bf16 streamed
    # a_ref     : (tk, tn) bf16
    # acc_in_ref: (D, tn) f32 running layer sum (previous layers)
    # xout_ref  : (D, tn) bf16 new layer embeddings (input to next layer)
    # acc_out_ref: (D, tn) f32 updated running sum (scaled on the final layer)
    # part_ref  : (D, tn) f32 partial-sum scratch over the k reduction
    k = pl.program_id(1)
    nk = pl.num_programs(1)

    if x_resident:
        off = pl.multiple_of(k * tk, 128)
        x_blk = x_ref[:, pl.ds(off, tk)]
    else:
        x_blk = x_ref[...]

    contrib = jnp.dot(x_blk, a_ref[...], preferred_element_type=jnp.float32)

    @pl.when(k == 0)
    def _():
        part_ref[...] = jnp.zeros_like(part_ref)

    @pl.when(k < nk - 1)
    def _():
        part_ref[...] += contrib

    @pl.when(k == nk - 1)
    def _():
        # Final reduction step: finish the dot directly into the outputs
        # (no extra accumulator copy), and fold in the running layer sum.
        x_new = part_ref[...] + contrib
        xout_ref[...] = x_new.astype(xout_ref.dtype)
        s = acc_in_ref[...] + x_new
        if scale != 1.0:
            s = s * scale
        acc_out_ref[...] = s


def _pick_tile(n, target, align=128):
    """Largest multiple of `align` that divides n and is <= max(target, align)."""
    t = min(n, max(target, align))
    t -= t % align
    while n % t != 0:
        t -= align
    return t


def _propagate(x_bf, adj_t, acc_in, *, scale, tn_target, tk_target, vmem_limit):
    D, N = x_bf.shape
    assert adj_t.shape == (N, N)
    assert N % 128 == 0, "tiled path requires padded N (multiple of 128)"
    tn = _pick_tile(N, tn_target)
    tk = _pick_tile(N, tk_target)

    # Keep X fully VMEM-resident (constant index map -> DMA'd once) when small.
    x_bytes = D * N * jnp.dtype(x_bf.dtype).itemsize
    x_resident = x_bytes <= min(8 << 20, vmem_limit // 8)
    if x_resident:
        x_spec = pl.BlockSpec((D, N), lambda j, k: (0, 0))
    else:
        x_spec = pl.BlockSpec((D, tk), lambda j, k: (0, k))

    grid = (N // tn, N // tk)  # reduction axis last; column axis parallel
    kernel = functools.partial(_propagate_kernel, tk=tk,
                               x_resident=x_resident, scale=scale)
    # Note: acc could additionally reuse its input HBM buffer via
    # input_output_aliases={2: 1}; kept un-aliased for robustness.
    return pl.pallas_call(
        kernel,
        out_shape=(jax.ShapeDtypeStruct((D, N), jnp.bfloat16),
                   jax.ShapeDtypeStruct((D, N), jnp.float32)),
        grid_spec=pltpu.PrefetchScalarGridSpec(
            num_scalar_prefetch=0,
            grid=grid,
            in_specs=[
                x_spec,
                pl.BlockSpec((tk, tn), lambda j, k: (k, j)),
                pl.BlockSpec((D, tn), lambda j, k: (0, j)),
            ],
            out_specs=[
                pl.BlockSpec((D, tn), lambda j, k: (0, j)),
                pl.BlockSpec((D, tn), lambda j, k: (0, j)),
            ],
            scratch_shapes=[pltpu.VMEM((D, tn), jnp.float32)],
        ),
        compiler_params=pltpu.CompilerParams(
            dimension_semantics=("parallel", "arbitrary"),
            vmem_limit_bytes=vmem_limit,
        ),
    )(x_bf, adj_t, acc_in)


# ----------------------------------------------------------------------------
# LightGCN forward (eval mode: no sparse dropout on norm_adj)
# ----------------------------------------------------------------------------
@functools.partial(
    jax.jit,
    static_argnames=("n_users", "n_items", "n_layers", "adj_is_symmetric",
                     "force_tiled"))
def lightgcn_forward(user_emb, item_emb, norm_adj, *, n_users, n_items,
                     n_layers, adj_is_symmetric=True, force_tiled=False):
    all_emb = jnp.concatenate([user_emb, item_emb], axis=0)      # (N, D)
    # TODO(synk): keep embeddings feature-major (D, N) model-wide to drop the
    # entry/exit transposes around the kernels.
    x0 = all_emb.T.astype(jnp.float32)                           # (D, N) lane-dense
    D, N = x0.shape

    # Feature-major propagation computes X_new = X @ A^T (== X @ A for the
    # symmetric-normalized adjacency LightGCN uses).
    adj_t = norm_adj if adj_is_symmetric else norm_adj.T
    adj_t = adj_t.astype(jnp.bfloat16)   # dominant HBM traffic -> bf16

    # Zero-pad N to a multiple of 128 so both paths keep lane-dense stores.
    # Exact: padded rows/cols of A and padded columns of X are all zero.
    n_pad = (-N) % 128
    if n_pad:
        x0 = jnp.pad(x0, ((0, 0), (0, n_pad)))
        adj_t = jnp.pad(adj_t, ((0, n_pad), (0, n_pad)))
    Np = N + n_pad

    budget = _vmem_budget_bytes()
    inv = 1.0 / float(n_layers + 1)

    if _use_fused_path(Np, D, budget, force_tiled):
        out = _fused_lightgcn(adj_t, x0, n_layers, vmem_limit=budget)   # (D, Np)
    else:
        tn_t, tk_t = _tile_targets(budget)
        x_bf = x0.astype(jnp.bfloat16)   # matmul input dtype; cast once here
        acc = x0                          # f32 running layer sum (layer 0)
        for layer in range(n_layers):
            scale = inv if layer == n_layers - 1 else 1.0
            x_bf, acc = _propagate(x_bf, adj_t, acc, scale=scale,
                                   tn_target=tn_t, tk_target=tk_t,
                                   vmem_limit=budget)
        out = acc                         # already scaled by 1/(n_layers+1)

    out_nd = out[:, :N].T                 # back to node-major (N, D)
    u_g = out_nd[:n_users]
    i_g = out_nd[n_users:n_users + n_items]
    return u_g, i_g


# ----------------------------------------------------------------------------
# Deterministic parameter / adjacency construction
# ----------------------------------------------------------------------------
def xavier_uniform(key, shape):
    fan_out, fan_in = shape  # nn.Embedding weight: (num_embeddings, emb_dim)
    bound = (6.0 / (fan_in + fan_out)) ** 0.5
    return jax.random.uniform(key, shape, jnp.float32, -bound, bound)


def build_norm_adj(key, n_users, n_items):
    """Dense symmetric-normalized bipartite adjacency D^-1/2 A D^-1/2."""
    n = n_users + n_items
    r = (jax.random.uniform(key, (n_users, n_items)) < 0.1).astype(jnp.float32)
    adj = jnp.zeros((n, n), jnp.float32)
    adj = adj.at[:n_users, n_users:].set(r)
    adj = adj.at[n_users:, :n_users].set(r.T)
    deg = jnp.sum(adj, axis=1)
    d_inv_sqrt = jnp.where(deg > 0, 1.0 / jnp.sqrt(jnp.maximum(deg, 1e-12)), 0.0)
    return adj * d_inv_sqrt[:, None] * d_inv_sqrt[None, :]


if __name__ == "__main__":
    # Small but tile-friendly config (N = n_users + n_items = 256).
    n_users, n_items, emb_dim = 96, 160, 32
    layer_size = [emb_dim, emb_dim, emb_dim]   # config['layer_size'] -> n_layers = 3
    n_layers = len(layer_size)

    key = jax.random.PRNGKey(0)
    k_u, k_i, k_adj = jax.random.split(key, 3)
    user_emb = xavier_uniform(k_u, (n_users, emb_dim))
    item_emb = xavier_uniform(k_i, (n_items, emb_dim))
    norm_adj = build_norm_adj(k_adj, n_users, n_items)

    # Pure-JAX f32 reference of the forward semantics.
    all_emb = jnp.concatenate([user_emb, item_emb], axis=0)
    embs = [all_emb]
    e = all_emb
    for _ in range(n_layers):
        e = norm_adj @ e
        embs.append(e)
    ref = jnp.mean(jnp.stack(embs, axis=0), axis=0)

    # Fused (single pallas_call) path — taken automatically at this size.
    u_g, i_g = lightgcn_forward(
        user_emb, item_emb, norm_adj,
        n_users=n_users, n_items=n_items, n_layers=n_layers,
    )
    jax.block_until_ready((u_g, i_g))

    # Tiled streaming path — forced, to exercise the general kernel too.
    u_t, i_t = lightgcn_forward(
        user_emb, item_emb, norm_adj,
        n_users=n_users, n_items=n_items, n_layers=n_layers, force_tiled=True,
    )
    jax.block_until_ready((u_t, i_t))

    # bf16 adjacency -> loosened tolerance (deliberate precision tradeoff).
    tol = dict(atol=2e-2, rtol=2e-2)
    assert u_g.shape == (n_users, emb_dim) and i_g.shape == (n_items, emb_dim)
    assert jnp.allclose(u_g, ref[:n_users], **tol), "fused user emb mismatch"
    assert jnp.allclose(i_g, ref[n_users:], **tol), "fused item emb mismatch"
    assert jnp.allclose(u_t, ref[:n_users], **tol), "tiled user emb mismatch"
    assert jnp.allclose(i_t, ref[n_users:], **tol), "tiled item emb mismatch"

    print("KERNEL_OK")
</pallas_src>

<mosaic_0001>
module attributes {stable_mosaic.version = 11 : i64} {
  func.func @_fused_lightgcn_kernel(%arg0: memref<256x256xbf16, #tpu.memory_space<vmem>>, %arg1: memref<32x256xf32, #tpu.memory_space<vmem>>, %arg2: memref<32x256xf32, #tpu.memory_space<vmem>>) attributes {dimension_semantics = [], scalar_prefetch = 0 : i64, scratch_operands = 0 : i64, tpu.core_type = #tpu.core_type<tc>} {
    %c0 = arith.constant 0 : index
    %c0_0 = arith.constant 0 : index
    %0 = vector.load %arg0[%c0, %c0_0] : memref<256x256xbf16, #tpu.memory_space<vmem>>, vector<256x256xbf16>
    %c0_1 = arith.constant 0 : index
    %c0_2 = arith.constant 0 : index
    %1 = vector.load %arg1[%c0_1, %c0_2] : memref<32x256xf32, #tpu.memory_space<vmem>>, vector<32x256xf32>
    %2 = arith.truncf %1 : vector<32x256xf32> to vector<32x256xbf16>
    %cst = arith.constant dense<0.000000e+00> : vector<32x256xf32>
    %3 = tpu.matmul %2, %0, %cst {dimension_numbers = #tpu.dot_dimension_numbers<[1], [0], [0], [1], [0, 0, 1, 1], [], []>} : vector<32x256xbf16>, vector<256x256xbf16>, vector<32x256xf32> -> vector<32x256xf32>
    %4 = arith.addf %1, %3 : vector<32x256xf32>
    %5 = arith.truncf %3 : vector<32x256xf32> to vector<32x256xbf16>
    %cst_3 = arith.constant dense<0.000000e+00> : vector<32x256xf32>
    %6 = tpu.matmul %5, %0, %cst_3 {dimension_numbers = #tpu.dot_dimension_numbers<[1], [0], [0], [1], [0, 0, 1, 1], [], []>} : vector<32x256xbf16>, vector<256x256xbf16>, vector<32x256xf32> -> vector<32x256xf32>
    %7 = arith.addf %4, %6 : vector<32x256xf32>
    %8 = arith.truncf %6 : vector<32x256xf32> to vector<32x256xbf16>
    %cst_4 = arith.constant dense<0.000000e+00> : vector<32x256xf32>
    %9 = tpu.matmul %8, %0, %cst_4 {dimension_numbers = #tpu.dot_dimension_numbers<[1], [0], [0], [1], [0, 0, 1, 1], [], []>} : vector<32x256xbf16>, vector<256x256xbf16>, vector<32x256xf32> -> vector<32x256xf32>
    %10 = arith.addf %7, %9 : vector<32x256xf32>
    %cst_5 = arith.constant 2.500000e-01 : f32
    %11 = vector.broadcast %cst_5 : f32 to vector<32x256xf32>
    %12 = arith.mulf %10, %11 : vector<32x256xf32>
    %c0_6 = arith.constant 0 : index
    %c0_7 = arith.constant 0 : index
    %13 = vector.load %arg2[%c0_6, %c0_7] : memref<32x256xf32, #tpu.memory_space<vmem>>, vector<32x256xf32>
    tpu.vector_store %arg2[%c0_6, %c0_7], %12 {strides = array<i32>} : memref<32x256xf32, #tpu.memory_space<vmem>>, vector<32x256xf32>,
    return
  }
}

</mosaic_0001>

<llo_original>
// kernel: lightgcn_forward.1
$region0: #{lightgcn_forward.1}
  #allocation0 [shape = 'u32[]', space=smem, size = 0x4, offset = 0x4, fixed_abs, tag = 'smem constant byte address 0x4 - core index']
  #allocation1 [shape = 'u32[144,128]{1,0:T(1,128)}', space=vmem, size = 0x12000, scoped, tag = 'internal scratch']
  %s0 = inlined_call_operand.vmem [shape: bf16[256,256], index: 0, kind: input, shape index: {}]
  %s1 = inlined_call_operand.vmem [shape: f32[32,256], index: 1, kind: input, shape index: {}]
  %s2 = inlined_call_operand.vmem [shape: f32[32,256], index: 2, kind: output, shape index: {}]
  %s3 = sld [smem:[#allocation0]]
  $region18: #{lightgcn_forward.1} parent=0
    _
  %s5 = ssub.s32 1, %s3
  %s6 = scalar_select 0, %s5, %s3
  // Predicated region
  $region2: #{lightgcn_forward.1} parent=0 // pred_check
    _
  $region3: #{lightgcn_forward.1} parent=0 // pred_check_branch
    %8 = sbr.rel (0) target = $region5
  $region4: #{lightgcn_forward.1} parent=0 // pred_region
    _
  $region5: #{lightgcn_forward.1} parent=0 // pred_fallthru
    _
  // Predicated region
  $region6: #{lightgcn_forward.1} parent=0 // pred_check
    _
  $region7: #{lightgcn_forward.1} parent=0 // pred_check_branch
    %10 = sbr.rel (0) target = $region9
  $region8: #{lightgcn_forward.1} parent=0 // pred_region
    _
  $region9: #{lightgcn_forward.1} parent=0 // pred_fallthru
    _
  %v11 = vld [vmem:[%s0] sm:$0xff]
  %v12 = vld [vmem:[%s0 + $0x8] sm:$0xff]
  %v13 = vld [vmem:[%s0 + $0x10] sm:$0xff]
  %v14 = vld [vmem:[%s0 + $0x18] sm:$0xff]
  %v15 = vld [vmem:[%s0 + $0x20] sm:$0xff]
  %v16 = vld [vmem:[%s0 + $0x28] sm:$0xff]
  %v17 = vld [vmem:[%s0 + $0x30] sm:$0xff]
  %v18 = vld [vmem:[%s0 + $0x38] sm:$0xff]
  %v19 = vld [vmem:[%s0 + $0x40] sm:$0xff]
  %v20 = vld [vmem:[%s0 + $0x48] sm:$0xff]
  %v21 = vld [vmem:[%s0 + $0x50] sm:$0xff]
  %v22 = vld [vmem:[%s0 + $0x58] sm:$0xff]
  %v23 = vld [vmem:[%s0 + $0x60] sm:$0xff]
  %v24 = vld [vmem:[%s0 + $0x68] sm:$0xff]
  %v25 = vld [vmem:[%s0 + $0x70] sm:$0xff]
  %v26 = vld [vmem:[%s0 + $0x78] sm:$0xff]
  %v27 = vld [vmem:[%s0 + $0x80] sm:$0xff]
  %v28 = vld [vmem:[%s0 + $0x88] sm:$0xff]
  %v29 = vld [vmem:[%s0 + $0x90] sm:$0xff]
  %v30 = vld [vmem:[%s0 + $0x98] sm:$0xff]
  %v31 = vld [vmem:[%s0 + $0xa0] sm:$0xff]
  %v32 = vld [vmem:[%s0 + $0xa8] sm:$0xff]
  %v33 = vld [vmem:[%s0 + $0xb0] sm:$0xff]
  %v34 = vld [vmem:[%s0 + $0xb8] sm:$0xff]
  %v35 = vld [vmem:[%s0 + $0xc0] sm:$0xff]
  %v36 = vld [vmem:[%s0 + $0xc8] sm:$0xff]
  %v37 = vld [vmem:[%s0 + $0xd0] sm:$0xff]
  %v38 = vld [vmem:[%s0 + $0xd8] sm:$0xff]
  %v39 = vld [vmem:[%s0 + $0xe0] sm:$0xff]
  %v40 = vld [vmem:[%s0 + $0xe8] sm:$0xff]
  %v41 = vld [vmem:[%s0 + $0xf0] sm:$0xff]
  %v42 = vld [vmem:[%s0 + $0xf8] sm:$0xff]
  %v43 = vld [vmem:[%s1] sm:$0xff]
  %v44 = vld [vmem:[%s1 + $0x8] sm:$0xff]
  %v45 = vld [vmem:[%s1 + $0x10] sm:$0xff]
  %v46 = vld [vmem:[%s1 + $0x18] sm:$0xff]
  %v47 = vld [vmem:[%s1 + $0x20] sm:$0xff]
  %v48 = vld [vmem:[%s1 + $0x28] sm:$0xff]
  %v49 = vld [vmem:[%s1 + $0x30] sm:$0xff]
  %v50 = vld [vmem:[%s1 + $0x38] sm:$0xff]
  %v51 = vpack.c.bf16 %v45, %v43
  %v52 = vpack.c.bf16 %v46, %v44
  %v53 = vpack.c.bf16 %v49, %v47
  %v54 = vpack.c.bf16 %v50, %v48
  %v87 = vunpack.c.l.b16 %v11
  %v88 = vunpack.c.h.b16 %v11
  %v89 = vunpack.c.l.b16 %v12
  %v90 = vunpack.c.h.b16 %v12
  %v91 = vunpack.c.l.b16 %v13
  %v92 = vunpack.c.h.b16 %v13
  %v93 = vunpack.c.l.b16 %v14
  %v94 = vunpack.c.h.b16 %v14
  %v95 = vunpack.c.l.b16 %v15
  %v96 = vunpack.c.h.b16 %v15
  %v97 = vunpack.c.l.b16 %v16
  %v98 = vunpack.c.h.b16 %v16
  %v99 = vunpack.c.l.b16 %v17
  %v100 = vunpack.c.h.b16 %v17
  %v101 = vunpack.c.l.b16 %v18
  %v102 = vunpack.c.h.b16 %v18
  %v103 = vunpack.c.l.b16 %v19
  %v104 = vunpack.c.h.b16 %v19
  %v105 = vunpack.c.l.b16 %v20
  %v106 = vunpack.c.h.b16 %v20
  %v107 = vunpack.c.l.b16 %v21
  %v108 = vunpack.c.h.b16 %v21
  %v109 = vunpack.c.l.b16 %v22
  %v110 = vunpack.c.h.b16 %v22
  %v111 = vunpack.c.l.b16 %v23
  %v112 = vunpack.c.h.b16 %v23
  %v113 = vunpack.c.l.b16 %v24
  %v114 = vunpack.c.h.b16 %v24
  %v115 = vunpack.c.l.b16 %v25
  %v116 = vunpack.c.h.b16 %v25
  %v117 = vunpack.c.l.b16 %v26
  %v118 = vunpack.c.h.b16 %v26
  %v119 = vunpack.c.l.b16 %v27
  %v120 = vunpack.c.h.b16 %v27
  %v121 = vunpack.c.l.b16 %v28
  %v122 = vunpack.c.h.b16 %v28
  %v123 = vunpack.c.l.b16 %v29
  %v124 = vunpack.c.h.b16 %v29
  %v125 = vunpack.c.l.b16 %v30
  %v126 = vunpack.c.h.b16 %v30
  %v127 = vunpack.c.l.b16 %v31
  %v128 = vunpack.c.h.b16 %v31
  %v129 = vunpack.c.l.b16 %v32
  %v130 = vunpack.c.h.b16 %v32
  %v131 = vunpack.c.l.b16 %v33
  %v132 = vunpack.c.h.b16 %v33
  %v133 = vunpack.c.l.b16 %v34
  %v134 = vunpack.c.h.b16 %v34
  %v135 = vunpack.c.l.b16 %v35
  %v136 = vunpack.c.h.b16 %v35
  %v137 = vunpack.c.l.b16 %v36
  %v138 = vunpack.c.h.b16 %v36
  %v139 = vunpack.c.l.b16 %v37
  %v140 = vunpack.c.h.b16 %v37
  %v141 = vunpack.c.l.b16 %v38
  %v142 = vunpack.c.h.b16 %v38
  %v143 = vunpack.c.l.b16 %v39
  %v144 = vunpack.c.h.b16 %v39
  %v145 = vunpack.c.l.b16 %v40
  %v146 = vunpack.c.h.b16 %v40
  %v147 = vunpack.c.l.b16 %v41
  %v148 = vunpack.c.h.b16 %v41
  %v149 = vunpack.c.l.b16 %v42
  %v150 = vunpack.c.h.b16 %v42
  %v151 = vpack.c.b16 %v89, %v87
  %v152 = vpack.c.b16 %v90, %v88
  %v153 = vpack.c.b16 %v93, %v91
  %v154 = vpack.c.b16 %v94, %v92
  %v155 = vpack.c.b16 %v97, %v95
  %v156 = vpack.c.b16 %v98, %v96
  %v157 = vpack.c.b16 %v101, %v99
  %v158 = vpack.c.b16 %v102, %v100
  %v159 = vpack.c.b16 %v105, %v103
  %v160 = vpack.c.b16 %v106, %v104
  %v161 = vpack.c.b16 %v109, %v107
  %v162 = vpack.c.b16 %v110, %v108
  %v163 = vpack.c.b16 %v113, %v111
  %v164 = vpack.c.b16 %v114, %v112
  %v165 = vpack.c.b16 %v117, %v115
  %v166 = vpack.c.b16 %v118, %v116
  %v167 = vpack.c.b16 %v121, %v119
  %v168 = vpack.c.b16 %v122, %v120
  %v169 = vpack.c.b16 %v125, %v123
  %v170 = vpack.c.b16 %v126, %v124
  %v171 = vpack.c.b16 %v129, %v127
  %v172 = vpack.c.b16 %v130, %v128
  %v173 = vpack.c.b16 %v133, %v131
  %v174 = vpack.c.b16 %v134, %v132
  %v175 = vpack.c.b16 %v137, %v135
  %v176 = vpack.c.b16 %v138, %v136
  %v177 = vpack.c.b16 %v141, %v139
  %v178 = vpack.c.b16 %v142, %v140
  %v179 = vpack.c.b16 %v145, %v143
  %v180 = vpack.c.b16 %v146, %v144
  %v181 = vpack.c.b16 %v149, %v147
  %v182 = vpack.c.b16 %v150, %v148
  %215 = vmatprep.subr.bf16.mxu0 %v166
  %216 = vmatpush1.bf16.msra.mxu0 %v165
  %217 = vmatprep.subr.bf16.mxu0 %v164
  %218 = vmatpush1.bf16.msra.mxu0 %v163
  %219 = vmatprep.subr.bf16.mxu0 %v162
  %220 = vmatpush1.bf16.msra.mxu0 %v161
  %221 = vmatprep.subr.bf16.mxu0 %v160
  %222 = vmatpush1.bf16.msra.mxu0 %v159
  %223 = vmatprep.subr.bf16.mxu0 %v158
  %224 = vmatpush1.bf16.msra.mxu0 %v157
  %225 = vmatprep.subr.bf16.mxu0 %v156
  %226 = vmatpush1.bf16.msra.mxu0 %v155
  %227 = vmatprep.subr.bf16.mxu0 %v154
  %228 = vmatpush1.bf16.msra.mxu0 %v153
  %229 = vmatprep.subr.bf16.mxu0 %v152
  %230 = vmatpush1.bf16.msra.mxu0 %v151
  %231 = vmatprep.subr.bf16.mxu0 %v182
  %232 = vmatpush2.bf16.msra.mxu0 %v181
  %233 = vmatprep.subr.bf16.mxu0 %v180
  %234 = vmatpush2.bf16.msra.mxu0 %v179
  %235 = vmatprep.subr.bf16.mxu0 %v178
  %236 = vmatpush2.bf16.msra.mxu0 %v177
  %237 = vmatprep.subr.bf16.mxu0 %v176
  %238 = vmatpush2.bf16.msra.mxu0 %v175
  %239 = vmatprep.subr.bf16.mxu0 %v174
  %240 = vmatpush2.bf16.msra.mxu0 %v173
  %241 = vmatprep.subr.bf16.mxu0 %v172
  %242 = vmatpush2.bf16.msra.mxu0 %v171
  %243 = vmatprep.subr.bf16.mxu0 %v170
  %244 = vmatpush2.bf16.msra.mxu0 %v169
  %245 = vmatprep.subr.bf16.mxu0 %v168
  %246 = vmatpush2.bf16.msra.mxu0 %v167
  %247 = vmatprep.mubr.bf16.mxu0 %v52
  %248 = vmatmul.mubr.bf16.gmra.mxu0 %v51
  %v249 = vpop.f32.mrf.mxu0
  %v250 = vadd.f32 0.0, %v249
  %v251 = vpop.f32.mrf.mxu0
  %v252 = vadd.f32 0.0, %v251
  %v253 = vpop.f32.mrf.mxu0
  %v254 = vadd.f32 0.0, %v253
  %v255 = vpop.f32.mrf.mxu0
  %v256 = vadd.f32 0.0, %v255
  %257 = vmatprep.mubr.bf16.mxu0 %v54
  %258 = vmatmul.mubr.bf16.gmra.mxu0 %v53
  %v259 = vpop.f32.mrf.mxu0
  %v260 = vadd.f32 0.0, %v259
  %v261 = vpop.f32.mrf.mxu0
  %v262 = vadd.f32 0.0, %v261
  %v263 = vpop.f32.mrf.mxu0
  %v264 = vadd.f32 0.0, %v263
  %v265 = vpop.f32.mrf.mxu0
  %v266 = vadd.f32 0.0, %v265
  %267 = vdwg.mxu0
  %v268 = vadd.f32 %v43, %v250
  %v269 = vadd.f32 %v44, %v252
  %v270 = vadd.f32 %v45, %v254
  %v271 = vadd.f32 %v46, %v256
  %v272 = vadd.f32 %v47, %v260
  %v273 = vadd.f32 %v48, %v262
  %v274 = vadd.f32 %v49, %v264
  %v275 = vadd.f32 %v50, %v266
  %v276 = vpack.c.bf16 %v254, %v250
  %v277 = vpack.c.bf16 %v256, %v252
  %v278 = vpack.c.bf16 %v264, %v260
  %v279 = vpack.c.bf16 %v266, %v262
  %280 = vmatprep.subr.bf16.mxu0 %v166
  %281 = vmatpush1.bf16.msra.mxu0 %v165
  %282 = vmatprep.subr.bf16.mxu0 %v164
  %283 = vmatpush1.bf16.msra.mxu0 %v163
  %284 = vmatprep.subr.bf16.mxu0 %v162
  %285 = vmatpush1.bf16.msra.mxu0 %v161
  %286 = vmatprep.subr.bf16.mxu0 %v160
  %287 = vmatpush1.bf16.msra.mxu0 %v159
  %288 = vmatprep.subr.bf16.mxu0 %v158
  %289 = vmatpush1.bf16.msra.mxu0 %v157
  %290 = vmatprep.subr.bf16.mxu0 %v156
  %291 = vmatpush1.bf16.msra.mxu0 %v155
  %292 = vmatprep.subr.bf16.mxu0 %v154
  %293 = vmatpush1.bf16.msra.mxu0 %v153
  %294 = vmatprep.subr.bf16.mxu0 %v152
  %295 = vmatpush1.bf16.msra.mxu0 %v151
  %296 = vmatprep.subr.bf16.mxu0 %v182
  %297 = vmatpush2.bf16.msra.mxu0 %v181
  %298 = vmatprep.subr.bf16.mxu0 %v180
  %299 = vmatpush2.bf16.msra.mxu0 %v179
  %300 = vmatprep.subr.bf16.mxu0 %v178
  %301 = vmatpush2.bf16.msra.mxu0 %v177
  %302 = vmatprep.subr.bf16.mxu0 %v176
  %303 = vmatpush2.bf16.msra.mxu0 %v175
  %304 = vmatprep.subr.bf16.mxu0 %v174
  %305 = vmatpush2.bf16.msra.mxu0 %v173
  %306 = vmatprep.subr.bf16.mxu0 %v172
  %307 = vmatpush2.bf16.msra.mxu0 %v171
  %308 = vmatprep.subr.bf16.mxu0 %v170
  %309 = vmatpush2.bf16.msra.mxu0 %v169
  %310 = vmatprep.subr.bf16.mxu0 %v168
  %311 = vmatpush2.bf16.msra.mxu0 %v167
  %312 = vmatprep.mubr.bf16.mxu0 %v277
  %313 = vmatmul.mubr.bf16.gmra.mxu0 %v276
  %v314 = vpop.f32.mrf.mxu0
  %v315 = vadd.f32 0.0, %v314
  %v316 = vpop.f32.mrf.mxu0
  %v317 = vadd.f32 0.0, %v316
  %v318 = vpop.f32.mrf.mxu0
  %v319 = vadd.f32 0.0, %v318
  %v320 = vpop.f32.mrf.mxu0
  %v321 = vadd.f32 0.0, %v320
  %322 = vmatprep.mubr.bf16.mxu0 %v279
  %323 = vmatmul.mubr.bf16.gmra.mxu0 %v278
  %v324 = vpop.f32.mrf.mxu0
  %v325 = vadd.f32 0.0, %v324
  %v326 = vpop.f32.mrf.mxu0
  %v327 = vadd.f32 0.0, %v326
  %v328 = vpop.f32.mrf.mxu0
  %v329 = vadd.f32 0.0, %v328
  %v330 = vpop.f32.mrf.mxu0
  %v331 = vadd.f32 0.0, %v330
  %332 = vdwg.mxu0
  %v333 = vadd.f32 %v268, %v315
  %v334 = vadd.f32 %v269, %v317
  %v335 = vadd.f32 %v270, %v319
  %v336 = vadd.f32 %v271, %v321
  %v337 = vadd.f32 %v272, %v325
  %v338 = vadd.f32 %v273, %v327
  %v339 = vadd.f32 %v274, %v329
  %v340 = vadd.f32 %v275, %v331
  %v341 = vpack.c.bf16 %v319, %v315
  %v342 = vpack.c.bf16 %v321, %v317
  %v343 = vpack.c.bf16 %v329, %v325
  %v344 = vpack.c.bf16 %v331, %v327
  %345 = vmatprep.subr.bf16.mxu0 %v166
  %346 = vmatpush1.bf16.msra.mxu0 %v165
  %347 = vmatprep.subr.bf16.mxu0 %v164
  %348 = vmatpush1.bf16.msra.mxu0 %v163
  %349 = vmatprep.subr.bf16.mxu0 %v162
  %350 = vmatpush1.bf16.msra.mxu0 %v161
  %351 = vmatprep.subr.bf16.mxu0 %v160
  %352 = vmatpush1.bf16.msra.mxu0 %v159
  %353 = vmatprep.subr.bf16.mxu0 %v158
  %354 = vmatpush1.bf16.msra.mxu0 %v157
  %355 = vmatprep.subr.bf16.mxu0 %v156
  %356 = vmatpush1.bf16.msra.mxu0 %v155
  %357 = vmatprep.subr.bf16.mxu0 %v154
  %358 = vmatpush1.bf16.msra.mxu0 %v153
  %359 = vmatprep.subr.bf16.mxu0 %v152
  %360 = vmatpush1.bf16.msra.mxu0 %v151
  %361 = vmatprep.subr.bf16.mxu0 %v182
  %362 = vmatpush2.bf16.msra.mxu0 %v181
  %363 = vmatprep.subr.bf16.mxu0 %v180
  %364 = vmatpush2.bf16.msra.mxu0 %v179
  %365 = vmatprep.subr.bf16.mxu0 %v178
  %366 = vmatpush2.bf16.msra.mxu0 %v177
  %367 = vmatprep.subr.bf16.mxu0 %v176
  %368 = vmatpush2.bf16.msra.mxu0 %v175
  %369 = vmatprep.subr.bf16.mxu0 %v174
  %370 = vmatpush2.bf16.msra.mxu0 %v173
  %371 = vmatprep.subr.bf16.mxu0 %v172
  %372 = vmatpush2.bf16.msra.mxu0 %v171
  %373 = vmatprep.subr.bf16.mxu0 %v170
  %374 = vmatpush2.bf16.msra.mxu0 %v169
  %375 = vmatprep.subr.bf16.mxu0 %v168
  %376 = vmatpush2.bf16.msra.mxu0 %v167
  %377 = vmatprep.mubr.bf16.mxu0 %v342
  %378 = vmatmul.mubr.bf16.gmra.mxu0 %v341
  %v379 = vpop.f32.mrf.mxu0
  %v380 = vadd.f32 0.0, %v379
  %v381 = vpop.f32.mrf.mxu0
  %v382 = vadd.f32 0.0, %v381
  %v383 = vpop.f32.mrf.mxu0
  %v384 = vadd.f32 0.0, %v383
  %v385 = vpop.f32.mrf.mxu0
  %v386 = vadd.f32 0.0, %v385
  %387 = vmatprep.mubr.bf16.mxu0 %v344
  %388 = vmatmul.mubr.bf16.gmra.mxu0 %v343
  %v389 = vpop.f32.mrf.mxu0
  %v390 = vadd.f32 0.0, %v389
  %v391 = vpop.f32.mrf.mxu0
  %v392 = vadd.f32 0.0, %v391
  %v393 = vpop.f32.mrf.mxu0
  %v394 = vadd.f32 0.0, %v393
  %v395 = vpop.f32.mrf.mxu0
  %v396 = vadd.f32 0.0, %v395
  %397 = vdwg.mxu0
  %v398 = vadd.f32 %v333, %v380
  %v399 = vadd.f32 %v334, %v382
  %v400 = vadd.f32 %v335, %v384
  %v401 = vadd.f32 %v336, %v386
  %v402 = vadd.f32 %v337, %v390
  %v403 = vadd.f32 %v338, %v392
  %v404 = vadd.f32 %v339, %v394
  %v405 = vadd.f32 %v340, %v396
  %v406 = vmul.f32 %v398, 0.25
  %v407 = vmul.f32 %v399, 0.25
  %v408 = vmul.f32 %v400, 0.25
  %v409 = vmul.f32 %v401, 0.25
  %v410 = vmul.f32 %v402, 0.25
  %v411 = vmul.f32 %v403, 0.25
  %v412 = vmul.f32 %v404, 0.25
  %v413 = vmul.f32 %v405, 0.25
  %414 = vst [vmem:[%s2] sm:$0xff] %v406
  %415 = vst [vmem:[%s2 + $0x8] sm:$0xff] %v407
  %416 = vst [vmem:[%s2 + $0x10] sm:$0xff] %v408
  %417 = vst [vmem:[%s2 + $0x18] sm:$0xff] %v409
  %418 = vst [vmem:[%s2 + $0x20] sm:$0xff] %v410
  %419 = vst [vmem:[%s2 + $0x28] sm:$0xff] %v411
  %420 = vst [vmem:[%s2 + $0x30] sm:$0xff] %v412
  %421 = vst [vmem:[%s2 + $0x38] sm:$0xff] %v413
  // Predicated region
  $region10: #{lightgcn_forward.1} parent=0 // pred_check
    _
  $region11: #{lightgcn_forward.1} parent=0 // pred_check_branch
    %423 = sbr.rel (0) target = $region13
  $region12: #{lightgcn_forward.1} parent=0 // pred_region
    _
  $region13: #{lightgcn_forward.1} parent=0 // pred_fallthru
    _
  // Predicated region
  $region14: #{lightgcn_forward.1} parent=0 // pred_check
    _
  $region15: #{lightgcn_forward.1} parent=0 // pred_check_branch
    %425 = sbr.rel (0) target = $region17
  $region16: #{lightgcn_forward.1} parent=0 // pred_region
    _
  $region17: #{lightgcn_forward.1} parent=0 // pred_fallthru
    _

</llo_original>
